<compile_context>
chip_gen: v6e
topology: v6e:2x2x1
jax: 0.10.0
libtpu: 0.0.40
codegen_flags: <defaults>
</compile_context>

<pallas_src>
import math

import jax
import jax.numpy as jnp
from jax.experimental import pallas as pl
from jax.experimental.pallas import tpu as pltpu

_LANE = 128        # vreg lane width
_SUBLANE = 8       # vreg sublane count
_LANE_CAP = 4096   # max lane-tile width considered (multiple of 128)


def _fusion_add_kernel(c_ref, s_ref, o_ref):
    # One VPU elementwise add per tile; dtype preserved.
    o_ref[...] = c_ref[...] + s_ref[...]


def _vmem_budget():
    """Return (per-input-tile byte budget, vmem_limit_bytes), per generation."""
    try:
        phys = pltpu.get_tpu_info().vmem_capacity_bytes
    except Exception:  # older jax / info unavailable -> conservative default
        phys = 0
    if phys >= (100 << 20):
        # v5e / v6e: 128 MiB physical VMEM -> ~8 MiB tiles, 64 MiB scoped limit.
        return 8 << 20, 64 << 20
    # v7x (64 MiB per TC) or unknown: 3 streams x 2 buffers x 5 MiB ~= 30 MiB
    # live, 40 MiB scoped limit leaves headroom for compiler scratch.
    return 5 << 20, 40 << 20


def _lane_dense_view(shape):
    """Pick a 2D (rows, lanes) view of the flattened array with a 128-dense
    lane axis whenever possible (confines masked stores to at most one tail
    tile over the whole array)."""
    n = int(math.prod(shape))
    if n % _LANE == 0:
        for k in range(min(_LANE_CAP, n) // _LANE, 0, -1):
            lanes = _LANE * k
            if n % lanes == 0:
                return n // lanes, lanes
    # Ragged fallback: keep the spatial extent on the lane axis.
    lanes = shape[-1] * shape[-2] if len(shape) >= 2 else shape[-1]
    return n // lanes, lanes


def _choose_tiles(rows, lanes, itemsize, tile_budget_bytes):
    """Byte-budget tile sizing obeying the (8, 128) block constraint."""
    # Lane tile: full extent if small enough, else a 128-multiple cap.
    tile_k = lanes if lanes <= _LANE_CAP else _LANE_CAP
    # Row tile: as many sublane groups as fit inside the per-tile byte budget.
    budget_rows = max(_SUBLANE, tile_budget_bytes // (tile_k * itemsize))
    budget_rows = (budget_rows // _SUBLANE) * _SUBLANE
    tile_r = rows if rows <= budget_rows else budget_rows
    return tile_r, tile_k


def _force_two_blocks(rows, lanes, tile_r, tile_k):
    """If the whole problem fits in one block, split it so both v7x
    TensorCores (megacore) get a block.  Near-free; up to ~2x on small
    inputs."""
    if pl.cdiv(rows, tile_r) * pl.cdiv(lanes, tile_k) > 1:
        return tile_r, tile_k
    if rows >= 2 * _SUBLANE:
        half = -(-rows // 2)
        tile_r = ((half + _SUBLANE - 1) // _SUBLANE) * _SUBLANE
    elif lanes >= 2 * _LANE:
        half = -(-lanes // 2)
        tile_k = ((half + _LANE - 1) // _LANE) * _LANE
    return tile_r, tile_k


def fusion_forward(content, style, alpha=0.5, *, donate_content=False):
    """Pallas TPU forward for Fusion: output = content + style.

    `alpha` is accepted for signature parity with the reference module but —
    exactly like the reference forward — it is not used.
    """
    del alpha  # unused by the reference module's forward
    assert content.shape == style.shape, "content/style shapes must match"
    assert content.dtype == style.dtype, "content/style dtypes must match"
    orig_shape = content.shape

    rows, lanes = _lane_dense_view(orig_shape)
    itemsize = jnp.dtype(content.dtype).itemsize
    tile_budget, vmem_limit = _vmem_budget()
    tile_r, tile_k = _choose_tiles(rows, lanes, itemsize, tile_budget)
    tile_r, tile_k = _force_two_blocks(rows, lanes, tile_r, tile_k)
    grid = (pl.cdiv(rows, tile_r), pl.cdiv(lanes, tile_k))

    c2 = content.reshape(rows, lanes)
    s2 = style.reshape(rows, lanes)

    # TODO(synk): a standalone add can never beat the HBM roofline; when used
    # inside a larger network, fuse this add into the producer/consumer op to
    # save a full read+write HBM round-trip.
    out = pl.pallas_call(
        _fusion_add_kernel,
        out_shape=jax.ShapeDtypeStruct((rows, lanes), content.dtype),
        grid=grid,
        in_specs=[pl.BlockSpec((tile_r, tile_k), lambda i, j: (i, j)),
                  pl.BlockSpec((tile_r, tile_k), lambda i, j: (i, j))],
        out_specs=pl.BlockSpec((tile_r, tile_k), lambda i, j: (i, j)),
        compiler_params=pltpu.CompilerParams(
            dimension_semantics=("parallel", "parallel"),
            vmem_limit_bytes=vmem_limit),
        input_output_aliases=({0: 0} if donate_content else {}),
    )(c2, s2)

    return out.reshape(orig_shape)


if __name__ == "__main__":
    key = jax.random.PRNGKey(0)
    kc, ks = jax.random.split(key, 2)

    # Shapes consistent with the module: NCHW feature maps.
    B, C, H, W = 2, 4, 16, 16
    content = jax.random.normal(kc, (B, C, H, W), jnp.float32)
    style = jax.random.normal(ks, (B, C, H, W), jnp.float32)

    out = fusion_forward(content, style, alpha=0.5)
    jax.block_until_ready(out)
    ref = content + style
    assert out.shape == (B, C, H, W)
    assert jnp.allclose(out, ref, atol=1e-6, rtol=1e-6)

    # Ragged-shape fallback path (lane dim not 128-aligned).
    c2 = jax.random.normal(kc, (2, 3, 5, 7), jnp.float32)
    s2 = jax.random.normal(ks, (2, 3, 5, 7), jnp.float32)
    out2 = fusion_forward(c2, s2)
    jax.block_until_ready(out2)
    assert jnp.allclose(out2, c2 + s2, atol=1e-6, rtol=1e-6)

    print("KERNEL_OK")
</pallas_src>

<mosaic_0001>
module attributes {stable_mosaic.version = 11 : i64} {
  func.func @_fusion_add_kernel(%arg0: i32, %arg1: i32, %arg2: memref<1x1024xf32, #tpu.memory_space<vmem>>, %arg3: memref<1x1024xf32, #tpu.memory_space<vmem>>, %arg4: memref<1x1024xf32, #tpu.memory_space<vmem>>) attributes {dimension_semantics = [#tpu.dimension_semantics<parallel>, #tpu.dimension_semantics<parallel>], iteration_bounds = array<i64: 1, 2>, scalar_prefetch = 0 : i64, scratch_operands = 0 : i64, tpu.core_type = #tpu.core_type<tc>, window_params = [{transform_indices = @transform_0, window_bounds = array<i64: 1, 1024>}, {transform_indices = @transform_1, window_bounds = array<i64: 1, 1024>}, {transform_indices = @transform_2, window_bounds = array<i64: 1, 1024>}]} {
    %c0 = arith.constant 0 : index
    %c0_0 = arith.constant 0 : index
    %0 = vector.load %arg2[%c0, %c0_0] : memref<1x1024xf32, #tpu.memory_space<vmem>>, vector<1x1024xf32>
    %c0_1 = arith.constant 0 : index
    %c0_2 = arith.constant 0 : index
    %1 = vector.load %arg3[%c0_1, %c0_2] : memref<1x1024xf32, #tpu.memory_space<vmem>>, vector<1x1024xf32>
    %2 = arith.addf %0, %1 : vector<1x1024xf32>
    %c0_3 = arith.constant 0 : index
    %c0_4 = arith.constant 0 : index
    %3 = vector.load %arg4[%c0_3, %c0_4] : memref<1x1024xf32, #tpu.memory_space<vmem>>, vector<1x1024xf32>
    tpu.vector_store %arg4[%c0_3, %c0_4], %2 {strides = array<i32>} : memref<1x1024xf32, #tpu.memory_space<vmem>>, vector<1x1024xf32>,
    return
  }
  func.func @transform_0(%arg0: i32, %arg1: i32) -> (i32, i32) {
    %c0_i32 = arith.constant 0 : i32
    return %arg0, %arg1 : i32, i32
  }
  func.func @transform_1(%arg0: i32, %arg1: i32) -> (i32, i32) {
    %c0_i32 = arith.constant 0 : i32
    return %arg0, %arg1 : i32, i32
  }
  func.func @transform_2(%arg0: i32, %arg1: i32) -> (i32, i32) {
    %c0_i32 = arith.constant 0 : i32
    return %arg0, %arg1 : i32, i32
  }
}

</mosaic_0001>

<llo_original>
// kernel: tpu_custom_call.1
$region0: #{tpu_custom_call.1}
  #allocation0 [shape = 'u32[]', space=smem, size = 0x4, offset = 0x4, fixed_abs, tag = 'smem constant byte address 0x4 - core index']
  #allocation1 [shape = 'u32[144,128]{1,0:T(1,128)}', space=vmem, size = 0x12000, scoped, tag = 'internal scratch']
  %s0 = inlined_call_operand.hbm [shape: f32[1,2048], index: 0, kind: input, shape index: {}]
  %s1 = inlined_call_operand.hbm [shape: f32[1,2048], index: 1, kind: input, shape index: {}]
  %s2 = inlined_call_operand.hbm [shape: f32[1,2048], index: 2, kind: output, shape index: {}]
  %s3 = sld [smem:[#allocation0]]
  $region49: #{tpu_custom_call.1} parent=0
    _
  %s5 = ssub.s32 1, %s3
  %s6 = scalar_select 0, %s5, %s3
  $region1: #{tpu_custom_call.1} parent=0
    #allocation2 [shape = 'u8[8192]{0}', space=vmem, size = 0x2000, scoped, tag = 'input window, operand 0']
    #allocation3 [shape = 's32[2]{0}', space=sflag, size = 0x8, scoped, tag = 'scoped memory for tpu_custom_call.1']
    #allocation4 [shape = 's32[2]{0}', space=sflag, size = 0x8, scoped, tag = 'scoped memory for tpu_custom_call.1']
    #allocation5 [shape = 'u8[8192]{0}', space=vmem, size = 0x2000, scoped, tag = 'input window, operand 1']
    #allocation6 [shape = 's32[2]{0}', space=sflag, size = 0x8, scoped, tag = 'scoped memory for tpu_custom_call.1']
    #allocation7 [shape = 'u8[8192]{0}', space=vmem, size = 0x2000, scoped, tag = 'output window, operand 0']
    %7 = vsyncpa [#allocation3], 0
    %s8 = scalar_lea.sflag [#allocation3], 1
    %9 = vsyncpa %s8, 0
    %10 = vsyncpa [#allocation6], 0
    %s11 = scalar_lea.sflag [#allocation6], 1
    %12 = vsyncpa %s11, 0
    %13 = vsyncpa [#allocation4], 0
    %s14 = scalar_lea.sflag [#allocation4], 1
    %15 = vsyncpa %s14, 0
    loop: start=0, step=1, limit=4
    $region2: #{tpu_custom_call.1} parent=1 // loop_pre_header
      _
    $region3: #{tpu_custom_call.1} parent=1 // loop_header
      %s17 = sphi 0, %s21
      %p18 = scmp.ge.s32.totalorder %s17, 4
      %s24 = sphi 0, %s36
      %s25 = sphi 0, %s32
      %s26 = sphi 0, %s24
      %s27 = sphi 0, %s25
      %s28 = sphi 0, %s26
      %s29 = sphi 0, %s27
      %s41 = sphi 0, %s43
      %s44 = sphi 0, %s41
      %s45 = sphi 0, %s44
      %s61 = sphi 0, %s45
      %s69 = sphi 0, %s71
      %s72 = sphi 0, %s69
      %s73 = sphi 0, %s72
      %s89 = sphi 0, %s73
      %s97 = sphi 0, %s99
      %s100 = sphi 0, %s97
      %s101 = sphi 0, %s100
      %s117 = sphi 0, %s101
    $region4: #{tpu_custom_call.1} parent=1 // loop_header_branch
      %20 = sbr.rel (%p18) target = $region8
    $region5: #{tpu_custom_call.1} parent=1 // loop_body
      %s22 = ssub.s32 %s17, 1
      %s23 = ssub.s32 %s17, 2
      %s30 = sadd.s32 1, %s25
      %p31 = scmp.ge.s32.totalorder %s30, 2
      %s32 = scalar_select %p31, 0, %s30
      %s33 = sadd.s32 1, %s24
      %s34 = scalar_select %p31, %s33, %s24
      %p35 = scmp.ge.s32.totalorder %s34, 1
      %s36 = scalar_select %p35, 0, %s34
      %s37 = ssub.s32 %s24, %s36
      %s38 = ssub.s32 %s25, %s32
      %s39 = sor.u32 %s37, %s38
      %p40 = scmp.eq.s32.totalorder %s39, 0
      %s42 = sadd.s32 %s41, 1
      %s43 = scalar_select %p40, %s41, %s42
      %p46 = pneg %p40
      %p47 = scmp.eq.s32.totalorder %s17, 1
      %p48 = por %p46, %p47
      %p49 = scmp.ne.s32.totalorder %s41, %s44
      %p50 = scmp.eq.s32.totalorder %s17, 0
      %p51 = por %p49, %p50
      %p52 = scmp.ne.s32.totalorder %s41, %s44
      %p53 = scmp.eq.s32.totalorder %s22, 1
      %p54 = por %p52, %p53
      %p55 = scmp.ne.s32.totalorder %s44, %s45
      %p56 = scmp.eq.s32.totalorder %s22, 0
      %p57 = por %p55, %p56
      %p58 = scmp.ne.s32.totalorder %s44, %s45
      %p59 = scmp.eq.s32.totalorder %s23, 1
      %p60 = por %p58, %p59
      %p62 = scmp.ne.s32.totalorder %s45, %s61
      %p63 = scmp.eq.s32.totalorder %s23, 0
      %p64 = por %p62, %p63
      %s65 = ssub.s32 %s24, %s36
      %s66 = ssub.s32 %s25, %s32
      %s67 = sor.u32 %s65, %s66
      %p68 = scmp.eq.s32.totalorder %s67, 0
      %s70 = sadd.s32 %s69, 1
      %s71 = scalar_select %p68, %s69, %s70
      %p74 = pneg %p68
      %p75 = scmp.eq.s32.totalorder %s17, 1
      %p76 = por %p74, %p75
      %p77 = scmp.ne.s32.totalorder %s69, %s72
      %p78 = scmp.eq.s32.totalorder %s17, 0
      %p79 = por %p77, %p78
      %p80 = scmp.ne.s32.totalorder %s69, %s72
      %p81 = scmp.eq.s32.totalorder %s22, 1
      %p82 = por %p80, %p81
      %p83 = scmp.ne.s32.totalorder %s72, %s73
      %p84 = scmp.eq.s32.totalorder %s22, 0
      %p85 = por %p83, %p84
      %p86 = scmp.ne.s32.totalorder %s72, %s73
      %p87 = scmp.eq.s32.totalorder %s23, 1
      %p88 = por %p86, %p87
      %p90 = scmp.ne.s32.totalorder %s73, %s89
      %p91 = scmp.eq.s32.totalorder %s23, 0
      %p92 = por %p90, %p91
      %s93 = ssub.s32 %s24, %s36
      %s94 = ssub.s32 %s25, %s32
      %s95 = sor.u32 %s93, %s94
      %p96 = scmp.eq.s32.totalorder %s95, 0
      %s98 = sadd.s32 %s97, 1
      %s99 = scalar_select %p96, %s97, %s98
      %p102 = pneg %p96
      %p103 = scmp.eq.s32.totalorder %s17, 1
      %p104 = por %p102, %p103
      %p105 = scmp.ne.s32.totalorder %s97, %s100
      %p106 = scmp.eq.s32.totalorder %s17, 0
      %p107 = por %p105, %p106
      %p108 = scmp.ne.s32.totalorder %s97, %s100
      %p109 = scmp.eq.s32.totalorder %s22, 1
      %p110 = por %p108, %p109
      %p111 = scmp.ne.s32.totalorder %s100, %s101
      %p112 = scmp.eq.s32.totalorder %s22, 0
      %p113 = por %p111, %p112
      %p114 = scmp.ne.s32.totalorder %s100, %s101
      %p115 = scmp.eq.s32.totalorder %s23, 1
      %p116 = por %p114, %p115
      %p118 = scmp.ne.s32.totalorder %s101, %s117
      %p119 = scmp.eq.s32.totalorder %s23, 0
      %p120 = por %p118, %p119
      %p121 = scmp.le.s32.totalorder 1, %s17
      %p122 = scmp.lt.s32.totalorder %s17, 3
      %p123 = pnand %p121, %p122
      %p124 = pneg %p123
      // Predicated region
      $region9: #{tpu_custom_call.1} parent=5 // pred_check
        _
      $region10: #{tpu_custom_call.1} parent=5 // pred_check_branch
        %126 = sbr.rel (%p123) target = $region12
      $region11: #{tpu_custom_call.1} parent=5 // pred_region
        %s127 = ssub.s32 %s17, 1
      $region12: #{tpu_custom_call.1} parent=5 // pred_fallthru
        _
      %p128 = scmp.lt.s32.totalorder %s17, 2
      // Predicated region
      $region13: #{tpu_custom_call.1} parent=5 // pred_check
        %p129 = pneg %p128
      $region14: #{tpu_custom_call.1} parent=5 // pred_check_branch
        %131 = sbr.rel (%p129) target = $region16
      $region15: #{tpu_custom_call.1} parent=5 // pred_region
        // Predicated region
        $region17: #{tpu_custom_call.1} parent=15 // pred_check
          %p132 = pneg %p51
        $region18: #{tpu_custom_call.1} parent=15 // pred_check_branch
          %134 = sbr.rel (%p132) target = $region20
        $region19: #{tpu_custom_call.1} parent=15 // pred_region
          %s135 = sand.u32 %s41, 1
          %s136 = scalar_lea.sflag [#allocation3], %s135
          %s137 = sand.u32 %s41, 1
          %s138 = smul.addr %s137, 8
          %s139 = scalar_lea.vmem [#allocation2], %s138
          %s140 = smul.u32 8, %s25
          %s142 = ssub.s32 128, 128
          %143 = vsyncadd %s136, %s142
          %s144 = smul.addr %s24, 16
          %s145 = sadd.s32 %s140, %s144
          %s146 = smul.addr %s145, 16
          %s147 = scalar_lea.hbm %s0, %s146
          %s149 = sshll.u32 %s139, 4
          %s150 = int_to_ptr.vmem [resolvable:$true] %s149
          %152 = dma.hbm_to_vmem [thread:$0]  %s147, 128, %s150, %s136
        $region20: #{tpu_custom_call.1} parent=15 // pred_fallthru
          _
        // Predicated region
        $region21: #{tpu_custom_call.1} parent=15 // pred_check
          %p153 = pneg %p79
        $region22: #{tpu_custom_call.1} parent=15 // pred_check_branch
          %155 = sbr.rel (%p153) target = $region24
        $region23: #{tpu_custom_call.1} parent=15 // pred_region
          %s156 = sand.u32 %s69, 1
          %s157 = scalar_lea.sflag [#allocation6], %s156
          %s158 = sand.u32 %s69, 1
          %s159 = smul.addr %s158, 8
          %s160 = scalar_lea.vmem [#allocation5], %s159
          %s161 = smul.u32 8, %s25
          %s163 = ssub.s32 128, 128
          %164 = vsyncadd %s157, %s163
          %s165 = smul.addr %s24, 16
          %s166 = sadd.s32 %s161, %s165
          %s167 = smul.addr %s166, 16
          %s168 = scalar_lea.hbm %s1, %s167
          %s170 = sshll.u32 %s160, 4
          %s171 = int_to_ptr.vmem [resolvable:$true] %s170
          %173 = dma.hbm_to_vmem [thread:$0]  %s168, 128, %s171, %s157
        $region24: #{tpu_custom_call.1} parent=15 // pred_fallthru
          _
      $region16: #{tpu_custom_call.1} parent=5 // pred_fallthru
        _
      %p174 = scmp.le.s32.totalorder 1, %s17
      %p175 = scmp.lt.s32.totalorder %s17, 3
      %p176 = pnand %p174, %p175
      %p177 = pneg %p176
      // Predicated region
      $region25: #{tpu_custom_call.1} parent=5 // pred_check
        _
      $region26: #{tpu_custom_call.1} parent=5 // pred_check_branch
        %179 = sbr.rel (%p176) target = $region28
      $region27: #{tpu_custom_call.1} parent=5 // pred_region
        %s180 = ssub.s32 %s17, 1
        %s181 = sand.u32 %s44, 1
        %s182 = scalar_lea.sflag [#allocation3], %s181
        %s183 = sand.u32 %s44, 1
        %s184 = smul.addr %s183, 8
        %s185 = scalar_lea.vmem [#allocation2], %s184
        // Predicated region
        $region29: #{tpu_custom_call.1} parent=27 // pred_check
          %p186 = pneg %p57
        $region30: #{tpu_custom_call.1} parent=27 // pred_check_branch
          %188 = sbr.rel (%p186) target = $region32
        $region31: #{tpu_custom_call.1} parent=27 // pred_region
          %189 = dma.done %s182, 128
        $region32: #{tpu_custom_call.1} parent=27 // pred_fallthru
          _
        %s190 = sand.u32 %s72, 1
        %s191 = scalar_lea.sflag [#allocation6], %s190
        %s192 = sand.u32 %s72, 1
        %s193 = smul.addr %s192, 8
        %s194 = scalar_lea.vmem [#allocation5], %s193
        // Predicated region
        $region33: #{tpu_custom_call.1} parent=27 // pred_check
          %p195 = pneg %p85
        $region34: #{tpu_custom_call.1} parent=27 // pred_check_branch
          %197 = sbr.rel (%p195) target = $region36
        $region35: #{tpu_custom_call.1} parent=27 // pred_region
          %198 = dma.done %s191, 128
        $region36: #{tpu_custom_call.1} parent=27 // pred_fallthru
          _
        %s199 = sand.u32 %s44, 1
        %s200 = scalar_lea.sflag [#allocation3], %s199
        %s201 = sand.u32 %s44, 1
        %s202 = smul.addr %s201, 8
        %s203 = scalar_lea.vmem [#allocation2], %s202
        %p204 = pneg %p57
        %p205 = pneg %p54
        %s206 = sand.u32 %s72, 1
        %s207 = scalar_lea.sflag [#allocation6], %s206
        %s208 = sand.u32 %s72, 1
        %s209 = smul.addr %s208, 8
        %s210 = scalar_lea.vmem [#allocation5], %s209
        %p211 = pneg %p85
        %p212 = pneg %p82
        %p213 = pneg %p113
        %p214 = pneg %p110
        %s215 = sand.u32 %s100, 1
        %s216 = scalar_lea.sflag [#allocation4], %s215
        %s217 = sand.u32 %s100, 1
        %s218 = smul.addr %s217, 8
        %s219 = scalar_lea.vmem [#allocation7], %s218
        %s220 = smul.u32 8, %s27
        %s221 = smul.u32 8, %s27
        %s222 = smul.u32 8, %s27
        %v223 = vld [vmem:[%s185] sm:$0xff]
        %v224 = vld [vmem:[%s194] sm:$0xff]
        %v225 = vadd.f32 %v223, %v224
        %226 = vst [vmem:[%s219] sm:$0xff] %v225
        %s227 = sand.u32 %s100, 1
        %s228 = scalar_lea.sflag [#allocation4], %s227
        %s229 = sand.u32 %s100, 1
        %s230 = smul.addr %s229, 8
        %s231 = scalar_lea.vmem [#allocation7], %s230
        // Predicated region
        $region37: #{tpu_custom_call.1} parent=27 // pred_check
          %p232 = pneg %p110
        $region38: #{tpu_custom_call.1} parent=27 // pred_check_branch
          %234 = sbr.rel (%p232) target = $region40
        $region39: #{tpu_custom_call.1} parent=27 // pred_region
          %s235 = smul.u32 8, %s27
          %s237 = ssub.s32 128, 128
          %238 = vsyncadd %s228, %s237
          %s239 = smul.addr %s26, 16
          %s240 = sadd.s32 %s235, %s239
          %s241 = smul.addr %s240, 16
          %s242 = scalar_lea.hbm %s2, %s241
          %s244 = sshll.u32 %s231, 4
          %s245 = int_to_ptr.vmem [resolvable:$true] %s244
          %247 = dma.vmem_to_hbm [thread:$0]  %s245, 128, %s242, %s228
        $region40: #{tpu_custom_call.1} parent=27 // pred_fallthru
          _
      $region28: #{tpu_custom_call.1} parent=5 // pred_fallthru
        _
      %p248 = scmp.le.s32.totalorder 2, %s17
      // Predicated region
      $region41: #{tpu_custom_call.1} parent=5 // pred_check
        %p249 = pneg %p248
      $region42: #{tpu_custom_call.1} parent=5 // pred_check_branch
        %251 = sbr.rel (%p249) target = $region44
      $region43: #{tpu_custom_call.1} parent=5 // pred_region
        %s252 = ssub.s32 %s17, 2
        // Predicated region
        $region45: #{tpu_custom_call.1} parent=43 // pred_check
          %p253 = pneg %p116
        $region46: #{tpu_custom_call.1} parent=43 // pred_check_branch
          %255 = sbr.rel (%p253) target = $region48
        $region47: #{tpu_custom_call.1} parent=43 // pred_region
          %s256 = sand.u32 %s101, 1
          %s257 = scalar_lea.sflag [#allocation4], %s256
          %s258 = sand.u32 %s101, 1
          %s259 = smul.addr %s258, 8
          %s260 = scalar_lea.vmem [#allocation7], %s259
          %261 = dma.done %s257, 128
        $region48: #{tpu_custom_call.1} parent=43 // pred_fallthru
          _
      $region44: #{tpu_custom_call.1} parent=5 // pred_fallthru
        _
    $region6: #{tpu_custom_call.1} parent=1 // loop_footer
      %s21 = sadd.s32 1, %s17
    $region7: #{tpu_custom_call.1} parent=1 // loop_footer_branch
      %16 = sbr.rel target = $region3
    $region8: #{tpu_custom_call.1} parent=1 // loop_exit
      _
    %262 = vsyncpa [#allocation3], 1
    %s263 = scalar_lea.sflag [#allocation3], 1
    %264 = vsyncpa %s263, 1
    %265 = vsyncpa [#allocation6], 1
    %s266 = scalar_lea.sflag [#allocation6], 1
    %267 = vsyncpa %s266, 1
    %268 = vsyncpa [#allocation4], 1
    %s269 = scalar_lea.sflag [#allocation4], 1
    %270 = vsyncpa %s269, 1

</llo_original>
